<compile_context>
chip_gen: v7x
topology: tpu7x:2x2x1
jax: 0.10.0
libtpu: 0.0.40
codegen_flags: <defaults>
</compile_context>

<pallas_src>
import functools
from typing import NamedTuple, Optional

import jax
import jax.numpy as jnp
from jax.experimental import pallas as pl
from jax.experimental.pallas import tpu as pltpu

_LANE = 128


# ---------------------------------------------------------------------------
# Kernel: fused   z = x @ Win + bin ;  out = z @ Wout + bout   on 2D row tiles.
# ---------------------------------------------------------------------------
def _bottleneck_rows_kernel(x_ref, w_in_ref, b_in_ref, w_out_ref, b_out_ref,
                            out_ref, z_ref):
    # x_ref: (TM, K), w_in_ref: (K, P), b_in_ref: (1, P)
    # w_out_ref: (P, Q), b_out_ref: (1, Q)
    # out_ref: (TM, Q), z_ref: (TM, P)
    z_f32 = jnp.dot(x_ref[...], w_in_ref[...],
                    preferred_element_type=jnp.float32) + b_in_ref[...]
    z = z_f32.astype(z_ref.dtype)
    z_ref[...] = z
    # Note: z is cast to the storage dtype before the second matmul; this
    # matches a low-precision PyTorch module (documented tolerance concern).
    out = jnp.dot(z, w_out_ref[...],
                  preferred_element_type=jnp.float32) + b_out_ref[...]
    out_ref[...] = out.astype(out_ref.dtype)


# ---------------------------------------------------------------------------
# Chip- and dtype-aware tiling.
# ---------------------------------------------------------------------------
def _vmem_limit_bytes():
    """Generation-aware VMEM limit: ~3/4 of physical, capped at 64 MiB."""
    try:
        cap = int(pltpu.get_tpu_info().vmem_capacity_bytes)
    except Exception:
        cap = 64 * 1024 * 1024  # conservative (v7x-sized) fallback
    return int(min(cap * 3 // 4, 64 * 1024 * 1024))


def _sublane_multiple(itemsize):
    # f32 -> 8, bf16 -> 16, int8/fp8 -> 32 rows per packed sublane tile.
    return max(8, 32 // int(itemsize))


def _choose_row_tile(m_rows, k, p, q, itemsize, vmem_limit, max_tile=2048):
    """Largest row tile whose x/z/out streams (double-buffered) plus the
    single-buffered resident weights/biases fit the VMEM limit, rounded to a
    dtype-aware sublane multiple, and split so the grid has >= 2 tiles."""
    sublane = _sublane_multiple(itemsize)
    if m_rows <= sublane:
        return int(m_rows)  # block equals full row extent (allowed)
    resident = (k * p + p * q + p + q) * itemsize     # weights/biases, 1x (Buffered(1))
    headroom = 2 * 1024 * 1024                        # compiler scratch / misc
    stream_budget = max(vmem_limit - resident - headroom, 1 * 1024 * 1024)
    bytes_per_row = 2 * (k + p + q) * itemsize        # x, z, out, double-buffered
    fit = stream_budget // max(bytes_per_row, 1)
    tm = min(m_rows, max_tile, max(int(fit), sublane))
    if tm >= m_rows:
        # Ensure >= 2 grid tiles so both v7x TensorCores get work.
        tm = -(-m_rows // 2)
    tm = max(sublane, (tm // sublane) * sublane)
    return int(min(tm, m_rows))


def _bottleneck_rows(x2, w_in, b_in, w_out, b_out, row_tile=None):
    """x2: (M, K). Returns (out2: (M, Q), z2: (M, P))."""
    m_rows, k = x2.shape
    p = w_in.shape[1]
    q = w_out.shape[1]
    itemsize = jnp.dtype(x2.dtype).itemsize
    vmem_limit = _vmem_limit_bytes()
    tm = int(row_tile) if row_tile is not None else _choose_row_tile(
        m_rows, k, p, q, itemsize, vmem_limit)
    tm = min(tm, m_rows)

    grid = (pl.cdiv(m_rows, tm),)
    resident = pl.Buffered(1)  # constant-index blocks: single VMEM buffer

    cost = pl.CostEstimate(
        flops=2 * m_rows * (k * p + p * q),
        transcendentals=0,
        bytes_accessed=(m_rows * (k + p + q) + k * p + p * q + p + q) * itemsize,
    )

    out2, z2 = pl.pallas_call(
        _bottleneck_rows_kernel,
        out_shape=(
            jax.ShapeDtypeStruct((m_rows, q), x2.dtype),  # output
            jax.ShapeDtypeStruct((m_rows, p), x2.dtype),  # projected_z
        ),
        grid=grid,
        in_specs=[
            pl.BlockSpec((tm, k), lambda i: (i, 0)),                              # x: streamed
            pl.BlockSpec((k, p), lambda i: (0, 0), pipeline_mode=resident),       # W_in
            pl.BlockSpec((1, p), lambda i: (0, 0), pipeline_mode=resident),       # b_in
            pl.BlockSpec((p, q), lambda i: (0, 0), pipeline_mode=resident),       # W_out
            pl.BlockSpec((1, q), lambda i: (0, 0), pipeline_mode=resident),       # b_out
        ],
        out_specs=(
            pl.BlockSpec((tm, q), lambda i: (i, 0)),
            pl.BlockSpec((tm, p), lambda i: (i, 0)),
        ),
        compiler_params=pltpu.CompilerParams(
            dimension_semantics=("parallel",),     # megacore sharding on v7x
            vmem_limit_bytes=vmem_limit,
        ),
        cost_estimate=cost,
    )(x2, w_in, b_in, w_out, b_out)
    return out2, z2


# ---------------------------------------------------------------------------
# Lane-dense "slab" layout: fold the MINIMAL number of tokens g into the lane
# dimension so every kernel load/store is a full-128-lane access.
# ---------------------------------------------------------------------------
def _min_fold_factor(n_tokens, dims):
    """Smallest divisor g of n_tokens with g*d % 128 == 0 for every d in dims."""
    for g in range(1, n_tokens + 1):
        if n_tokens % g:
            continue
        if all((g * d) % _LANE == 0 for d in dims):
            return g
    return None


def _block_diagonal(w, n):
    """(K, P) -> (n*K, n*P) with `w` on the diagonal blocks, zeros elsewhere."""
    k, p = w.shape
    eye = jnp.eye(n, dtype=w.dtype)
    return (eye[:, None, :, None] * w[None, :, None, :]).reshape(n * k, n * p)


class BottleneckParams(NamedTuple):
    w_in: jax.Array     # (K, P)  -- possibly block-diagonal (token-folded)
    b_in: jax.Array     # (1, P)
    w_out: jax.Array    # (P, Q)
    b_out: jax.Array    # (1, Q)
    fold_g: int         # tokens folded into the lane dim (1 => general layout)
    d_proj: int         # original project_dim (pre-fold)
    d_out: int          # original output_dim  (pre-fold)


def prepare_bottleneck_params(w_in, b_in, w_out, b_out, token_nums,
                              batch_hint=None, layout="auto",
                              max_fold_weight_bytes=1 << 20, min_rows=64):
    """Build (possibly token-folded) weights ONCE; reuse across forward calls.

    layout: "rows" (never fold), "slab" (force the minimal fold), or "auto"
    (fold only when the fold factor exists, the block-diagonal weights stay
    small, and enough rows remain to pipeline / feed both v7x TensorCores)."""
    d_in, d_proj = w_in.shape
    d_bot, d_out = w_out.shape
    assert d_bot == d_proj, "regularizer=None => project_dim == bottleneck_dim"
    itemsize = jnp.dtype(w_in.dtype).itemsize

    fold_g = 1
    if layout != "rows":
        g = _min_fold_factor(token_nums, (d_in, d_proj, d_out))
        if g is not None and g > 1:
            w_bytes = ((g * d_in) * (g * d_proj) +
                       (g * d_proj) * (g * d_out) +
                       g * (d_proj + d_out)) * itemsize
            if layout == "slab":
                fold_g = g
            elif layout == "auto":
                rows_ok = (batch_hint is not None and
                           (batch_hint * token_nums) // g >= min_rows)
                if rows_ok and w_bytes <= max_fold_weight_bytes:
                    fold_g = g

    if fold_g > 1:
        wi = _block_diagonal(w_in, fold_g)
        bi = jnp.tile(b_in, (1, fold_g))
        wo = _block_diagonal(w_out, fold_g)
        bo = jnp.tile(b_out, (1, fold_g))
    else:
        wi, bi, wo, bo = w_in, b_in, w_out, b_out

    return BottleneckParams(wi, bi, wo, bo, int(fold_g), int(d_proj), int(d_out))


# ---------------------------------------------------------------------------
# Public forward.
# ---------------------------------------------------------------------------
@functools.partial(jax.jit,
                   static_argnames=("fold_g", "d_proj", "d_out", "row_tile"))
def _bottleneck_forward_impl(x, w_in, b_in, w_out, b_out, *, fold_g, d_proj,
                             d_out, row_tile=None):
    batch, n_tokens, d_in = x.shape

    # Input-norm diagnostics in plain JAX (keeping them in the kernel would
    # force the full (B,N,D) array into one block and break row tiling).
    xf = x[:, 0, :].astype(jnp.float32)
    xl = x[:, -1, :].astype(jnp.float32)
    norm_first = jnp.mean(jnp.sqrt(jnp.sum(xf * xf, axis=-1)))
    norm_last = jnp.mean(jnp.sqrt(jnp.sum(xl * xl, axis=-1)))

    rows = (batch * n_tokens) // fold_g
    x2 = x.reshape(rows, fold_g * d_in)

    out2, z2 = _bottleneck_rows(x2, w_in, b_in, w_out, b_out, row_tile=row_tile)

    output = out2.reshape(batch, n_tokens, d_out)
    z = z2.reshape(batch, n_tokens, d_proj)

    return {
        "output": output,
        "bottleneck_rep": z,
        "projected_z": z,
        "input_norm_first": norm_first,
        "input_norm_last": norm_last,
    }


def bottleneck_forward(x, params: BottleneckParams,
                       row_tile: Optional[int] = None):
    """x: (B, N, input_dim). params from prepare_bottleneck_params()."""
    return _bottleneck_forward_impl(
        x, params.w_in, params.b_in, params.w_out, params.b_out,
        fold_g=params.fold_g, d_proj=params.d_proj, d_out=params.d_out,
        row_tile=row_tile)


def init_linear_params(key, in_dim, out_dim):
    """PyTorch-default-like init: U(-1/sqrt(in_dim), 1/sqrt(in_dim)).
    Returned weight is already transposed to (in_dim, out_dim)."""
    kw, kb = jax.random.split(key)
    bound = 1.0 / jnp.sqrt(jnp.float32(in_dim))
    w = jax.random.uniform(kw, (in_dim, out_dim), jnp.float32, -bound, bound)
    b = jax.random.uniform(kb, (1, out_dim), jnp.float32, -bound, bound)
    return w, b


if __name__ == "__main__":
    # Module config (small, consistent with the Bottleneck signature):
    batch = 2
    token_nums = 8
    input_dim = 32
    bottleneck_dim = 16
    output_dim = 32
    project_dim = bottleneck_dim        # norm=None, regularizer=None

    key = jax.random.PRNGKey(0)
    k_x, k_in, k_out, k_x3 = jax.random.split(key, 4)

    x = jax.random.normal(k_x, (batch, token_nums, input_dim), jnp.float32)
    w_in, b_in = init_linear_params(k_in, input_dim, project_dim)
    w_out, b_out = init_linear_params(k_out, bottleneck_dim, output_dim)

    # Pure-JAX reference.
    z_ref = x @ w_in + b_in
    out_ref = z_ref @ w_out + b_out
    nf_ref = jnp.mean(jnp.linalg.norm(x[:, 0, :], axis=-1))
    nl_ref = jnp.mean(jnp.linalg.norm(x[:, -1, :], axis=-1))

    def check(res, z_r, o_r, nf_r, nl_r, tag):
        assert res["output"].shape == o_r.shape, tag
        assert res["projected_z"].shape == z_r.shape, tag
        assert jnp.allclose(res["output"], o_r, atol=1e-4), tag
        assert jnp.allclose(res["projected_z"], z_r, atol=1e-4), tag
        assert jnp.allclose(res["bottleneck_rep"], z_r, atol=1e-4), tag
        assert jnp.allclose(res["input_norm_first"], nf_r, atol=1e-4), tag
        assert jnp.allclose(res["input_norm_last"], nl_r, atol=1e-4), tag

    # 1) Auto layout: with B*N/g = 2 rows the slab gate correctly rejects the
    #    fold, so this exercises the general row-tiled path (16 rows, >= 2 tiles).
    params_auto = prepare_bottleneck_params(w_in, b_in, w_out, b_out,
                                            token_nums, batch_hint=batch,
                                            layout="auto")
    res = bottleneck_forward(x, params_auto)
    jax.block_until_ready(res)
    check(res, z_ref, out_ref, nf_ref, nl_ref, "auto/rows")

    # 2) Forced lane-dense slab layout (minimal token fold g=8 here); folded
    #    block-diagonal weights were built once in prepare_bottleneck_params.
    params_slab = prepare_bottleneck_params(w_in, b_in, w_out, b_out,
                                            token_nums, layout="slab")
    res = bottleneck_forward(x, params_slab)
    jax.block_until_ready(res)
    check(res, z_ref, out_ref, nf_ref, nl_ref, "slab")

    # 3) Ragged last block: rows (5*8=40) not a multiple of the row tile (16).
    batch3 = 5
    x3 = jax.random.normal(k_x3, (batch3, token_nums, input_dim), jnp.float32)
    z3_ref = x3 @ w_in + b_in
    out3_ref = z3_ref @ w_out + b_out
    nf3_ref = jnp.mean(jnp.linalg.norm(x3[:, 0, :], axis=-1))
    nl3_ref = jnp.mean(jnp.linalg.norm(x3[:, -1, :], axis=-1))
    params_rows = prepare_bottleneck_params(w_in, b_in, w_out, b_out,
                                            token_nums, layout="rows")
    res3 = bottleneck_forward(x3, params_rows, row_tile=16)
    jax.block_until_ready(res3)
    check(res3, z3_ref, out3_ref, nf3_ref, nl3_ref, "ragged")

    print("KERNEL_OK")
</pallas_src>

<mosaic_0001>
module attributes {stable_mosaic.version = 11 : i64} {
  func.func @_bottleneck_rows_kernel(%arg0: i32, %arg1: memref<8x32xf32, #tpu.memory_space<vmem>>, %arg2: memref<32x16xf32, #tpu.memory_space<vmem>>, %arg3: memref<1x16xf32, #tpu.memory_space<vmem>>, %arg4: memref<16x32xf32, #tpu.memory_space<vmem>>, %arg5: memref<1x32xf32, #tpu.memory_space<vmem>>, %arg6: memref<8x32xf32, #tpu.memory_space<vmem>>, %arg7: memref<8x16xf32, #tpu.memory_space<vmem>>) attributes {dimension_semantics = [#tpu.dimension_semantics<parallel>], iteration_bounds = array<i64: 2>, scalar_prefetch = 0 : i64, scratch_operands = 0 : i64, tpu.core_type = #tpu.core_type<tc>, window_params = [{transform_indices = @transform_0, window_bounds = array<i64: 8, 32>}, {pipeline_mode = #tpu.pipeline_mode<synchronous>, transform_indices = @transform_1, window_bounds = array<i64: 32, 16>}, {pipeline_mode = #tpu.pipeline_mode<synchronous>, transform_indices = @transform_2, window_bounds = array<i64: 1, 16>}, {pipeline_mode = #tpu.pipeline_mode<synchronous>, transform_indices = @transform_3, window_bounds = array<i64: 16, 32>}, {pipeline_mode = #tpu.pipeline_mode<synchronous>, transform_indices = @transform_4, window_bounds = array<i64: 1, 32>}, {transform_indices = @transform_5, window_bounds = array<i64: 8, 32>}, {transform_indices = @transform_6, window_bounds = array<i64: 8, 16>}]} {
    %c0 = arith.constant 0 : index
    %c0_0 = arith.constant 0 : index
    %0 = vector.load %arg1[%c0, %c0_0] : memref<8x32xf32, #tpu.memory_space<vmem>>, vector<8x32xf32>
    %c0_1 = arith.constant 0 : index
    %c0_2 = arith.constant 0 : index
    %1 = vector.load %arg2[%c0_1, %c0_2] : memref<32x16xf32, #tpu.memory_space<vmem>>, vector<32x16xf32>
    %cst = arith.constant dense<0.000000e+00> : vector<8x16xf32>
    %2 = tpu.matmul %0, %1, %cst {dimension_numbers = #tpu.dot_dimension_numbers<[1], [0], [0], [1], [0, 0, 1, 1], [], []>} : vector<8x32xf32>, vector<32x16xf32>, vector<8x16xf32> -> vector<8x16xf32>
    %c0_3 = arith.constant 0 : index
    %c0_4 = arith.constant 0 : index
    %3 = vector.load %arg3[%c0_3, %c0_4] : memref<1x16xf32, #tpu.memory_space<vmem>>, vector<1x16xf32>
    %4 = vector.broadcast %3 : vector<1x16xf32> to vector<8x16xf32>
    %5 = arith.addf %2, %4 : vector<8x16xf32>
    %c0_5 = arith.constant 0 : index
    %c0_6 = arith.constant 0 : index
    %6 = vector.load %arg7[%c0_5, %c0_6] : memref<8x16xf32, #tpu.memory_space<vmem>>, vector<8x16xf32>
    tpu.vector_store %arg7[%c0_5, %c0_6], %5 {strides = array<i32>} : memref<8x16xf32, #tpu.memory_space<vmem>>, vector<8x16xf32>,
    %c0_7 = arith.constant 0 : index
    %c0_8 = arith.constant 0 : index
    %7 = vector.load %arg4[%c0_7, %c0_8] : memref<16x32xf32, #tpu.memory_space<vmem>>, vector<16x32xf32>
    %cst_9 = arith.constant dense<0.000000e+00> : vector<8x32xf32>
    %8 = tpu.matmul %5, %7, %cst_9 {dimension_numbers = #tpu.dot_dimension_numbers<[1], [0], [0], [1], [0, 0, 1, 1], [], []>} : vector<8x16xf32>, vector<16x32xf32>, vector<8x32xf32> -> vector<8x32xf32>
    %c0_10 = arith.constant 0 : index
    %c0_11 = arith.constant 0 : index
    %9 = vector.load %arg5[%c0_10, %c0_11] : memref<1x32xf32, #tpu.memory_space<vmem>>, vector<1x32xf32>
    %10 = vector.broadcast %9 : vector<1x32xf32> to vector<8x32xf32>
    %11 = arith.addf %8, %10 : vector<8x32xf32>
    %c0_12 = arith.constant 0 : index
    %c0_13 = arith.constant 0 : index
    %12 = vector.load %arg6[%c0_12, %c0_13] : memref<8x32xf32, #tpu.memory_space<vmem>>, vector<8x32xf32>
    tpu.vector_store %arg6[%c0_12, %c0_13], %11 {strides = array<i32>} : memref<8x32xf32, #tpu.memory_space<vmem>>, vector<8x32xf32>,
    return
  }
  func.func @transform_0(%arg0: i32) -> (i32, i32) {
    %c0_i32 = arith.constant 0 : i32
    %c0_i32_0 = arith.constant 0 : i32
    return %arg0, %c0_i32 : i32, i32
  }
  func.func @transform_1(%arg0: i32) -> (i32, i32) {
    %c0_i32 = arith.constant 0 : i32
    %c0_i32_0 = arith.constant 0 : i32
    %c0_i32_1 = arith.constant 0 : i32
    return %c0_i32, %c0_i32_0 : i32, i32
  }
  func.func @transform_2(%arg0: i32) -> (i32, i32) {
    %c0_i32 = arith.constant 0 : i32
    %c0_i32_0 = arith.constant 0 : i32
    %c0_i32_1 = arith.constant 0 : i32
    return %c0_i32, %c0_i32_0 : i32, i32
  }
  func.func @transform_3(%arg0: i32) -> (i32, i32) {
    %c0_i32 = arith.constant 0 : i32
    %c0_i32_0 = arith.constant 0 : i32
    %c0_i32_1 = arith.constant 0 : i32
    return %c0_i32, %c0_i32_0 : i32, i32
  }
  func.func @transform_4(%arg0: i32) -> (i32, i32) {
    %c0_i32 = arith.constant 0 : i32
    %c0_i32_0 = arith.constant 0 : i32
    %c0_i32_1 = arith.constant 0 : i32
    return %c0_i32, %c0_i32_0 : i32, i32
  }
  func.func @transform_5(%arg0: i32) -> (i32, i32) {
    %c0_i32 = arith.constant 0 : i32
    %c0_i32_0 = arith.constant 0 : i32
    return %arg0, %c0_i32 : i32, i32
  }
  func.func @transform_6(%arg0: i32) -> (i32, i32) {
    %c0_i32 = arith.constant 0 : i32
    %c0_i32_0 = arith.constant 0 : i32
    return %arg0, %c0_i32 : i32, i32
  }
}

</mosaic_0001>

<llo_original>
// kernel: _bottleneck_forward_impl.1
$region0: #{_bottleneck_forward_impl.1}
  #allocation0 [shape = 'u32[]', space=smem, size = 0x4, offset = 0x4, fixed_abs, tag = 'smem constant byte address 0x4 - core index']
  #allocation1 [shape = 'u32[144,128]{1,0:T(1,128)}', space=vmem, size = 0x12000, scoped, tag = 'internal scratch']
  %s0 = inlined_call_operand.vmem [shape: f32[16,32], index: 0, kind: input, shape index: {}]
  %s1 = inlined_call_operand.vmem [shape: f32[32,16], index: 1, kind: input, shape index: {}]
  %s2 = inlined_call_operand.vmem [shape: f32[1,16], index: 2, kind: input, shape index: {}]
  %s3 = inlined_call_operand.vmem [shape: f32[16,32], index: 3, kind: input, shape index: {}]
  %s4 = inlined_call_operand.vmem [shape: f32[1,32], index: 4, kind: input, shape index: {}]
  %s5 = inlined_call_operand.hbm [shape: f32[16,32], index: 5, kind: output, shape index: {0}]
  %s6 = inlined_call_operand.vmem [shape: f32[16,16], index: 6, kind: output, shape index: {1}]
  %7 = xla_tuple %s5, %s6
  %s8 = sld [smem:[#allocation0]]
  $region61: #{_bottleneck_forward_impl.1} parent=0
    _
  %s10 = ssub.s32 1, %s8
  %s11 = scalar_select 0, %s10, %s8
  $region1: #{_bottleneck_forward_impl.1} parent=0
    #allocation2 [shape = 'u8[8192]{0}', space=vmem, size = 0x2000, scoped, tag = 'output window, operand 0']
    #allocation3 [shape = 's32[2]{0}', space=sflag, size = 0x8, scoped, tag = 'scoped memory for _bottleneck_forward_impl.1']
    %12 = vsyncpa [#allocation3], 0
    %s13 = scalar_lea.sflag [#allocation3], 1
    %14 = vsyncpa %s13, 0
    loop: start=0, step=1, limit=4
    $region2: #{_bottleneck_forward_impl.1} parent=1 // loop_pre_header
      _
    $region3: #{_bottleneck_forward_impl.1} parent=1 // loop_header
      %s16 = sphi 0, %s20
      %p17 = scmp.ge.s32.totalorder %s16, 4
      %s26 = sphi 0, %s28
      %s29 = sphi 0, %s26
      %s30 = sphi 0, %s29
      %s46 = sphi 0, %s30
      %s50 = sphi 0, %s50
      %s52 = sphi 0, %s50
      %s53 = sphi 0, %s52
      %s67 = sphi 0, %s53
      %s71 = sphi 0, %s71
      %s73 = sphi 0, %s71
      %s74 = sphi 0, %s73
      %s88 = sphi 0, %s74
      %s92 = sphi 0, %s92
      %s94 = sphi 0, %s92
      %s95 = sphi 0, %s94
      %s109 = sphi 0, %s95
      %s113 = sphi 0, %s113
      %s115 = sphi 0, %s113
      %s116 = sphi 0, %s115
      %s130 = sphi 0, %s116
      %s136 = sphi 0, %s138
      %s139 = sphi 0, %s136
      %s140 = sphi 0, %s139
      %s156 = sphi 0, %s140
      %s162 = sphi 0, %s164
      %s165 = sphi 0, %s162
      %s166 = sphi 0, %s165
      %s182 = sphi 0, %s166
    $region4: #{_bottleneck_forward_impl.1} parent=1 // loop_header_branch
      %19 = sbr.rel (%p17) target = $region8
    $region5: #{_bottleneck_forward_impl.1} parent=1 // loop_body
      %s21 = ssub.s32 %s16, 1
      %s22 = ssub.s32 %s16, 2
      %s23 = sadd.s32 %s16, 1
      %s24 = ssub.s32 %s16, %s23
      %p25 = scmp.eq.s32.totalorder %s24, 0
      %s27 = sadd.s32 %s26, 1
      %s28 = scalar_select %p25, %s26, %s27
      %p31 = pneg %p25
      %p32 = scmp.eq.s32.totalorder %s16, 1
      %p33 = por %p31, %p32
      %p34 = scmp.ne.s32.totalorder %s26, %s29
      %p35 = scmp.eq.s32.totalorder %s16, 0
      %p36 = por %p34, %p35
      %p37 = scmp.ne.s32.totalorder %s26, %s29
      %p38 = scmp.eq.s32.totalorder %s21, 1
      %p39 = por %p37, %p38
      %p40 = scmp.ne.s32.totalorder %s29, %s30
      %p41 = scmp.eq.s32.totalorder %s21, 0
      %p42 = por %p40, %p41
      %p43 = scmp.ne.s32.totalorder %s29, %s30
      %p44 = scmp.eq.s32.totalorder %s22, 1
      %p45 = por %p43, %p44
      %p47 = scmp.ne.s32.totalorder %s30, %s46
      %p48 = scmp.eq.s32.totalorder %s22, 0
      %p49 = por %p47, %p48
      %s51 = sadd.s32 %s50, 1
      %p54 = scmp.eq.s32.totalorder %s16, 1
      %p55 = scmp.ne.s32.totalorder %s50, %s52
      %p56 = scmp.eq.s32.totalorder %s16, 0
      %p57 = por %p55, %p56
      %p58 = scmp.ne.s32.totalorder %s50, %s52
      %p59 = scmp.eq.s32.totalorder %s21, 1
      %p60 = por %p58, %p59
      %p61 = scmp.ne.s32.totalorder %s52, %s53
      %p62 = scmp.eq.s32.totalorder %s21, 0
      %p63 = por %p61, %p62
      %p64 = scmp.ne.s32.totalorder %s52, %s53
      %p65 = scmp.eq.s32.totalorder %s22, 1
      %p66 = por %p64, %p65
      %p68 = scmp.ne.s32.totalorder %s53, %s67
      %p69 = scmp.eq.s32.totalorder %s22, 0
      %p70 = por %p68, %p69
      %s72 = sadd.s32 %s71, 1
      %p75 = scmp.eq.s32.totalorder %s16, 1
      %p76 = scmp.ne.s32.totalorder %s71, %s73
      %p77 = scmp.eq.s32.totalorder %s16, 0
      %p78 = por %p76, %p77
      %p79 = scmp.ne.s32.totalorder %s71, %s73
      %p80 = scmp.eq.s32.totalorder %s21, 1
      %p81 = por %p79, %p80
      %p82 = scmp.ne.s32.totalorder %s73, %s74
      %p83 = scmp.eq.s32.totalorder %s21, 0
      %p84 = por %p82, %p83
      %p85 = scmp.ne.s32.totalorder %s73, %s74
      %p86 = scmp.eq.s32.totalorder %s22, 1
      %p87 = por %p85, %p86
      %p89 = scmp.ne.s32.totalorder %s74, %s88
      %p90 = scmp.eq.s32.totalorder %s22, 0
      %p91 = por %p89, %p90
      %s93 = sadd.s32 %s92, 1
      %p96 = scmp.eq.s32.totalorder %s16, 1
      %p97 = scmp.ne.s32.totalorder %s92, %s94
      %p98 = scmp.eq.s32.totalorder %s16, 0
      %p99 = por %p97, %p98
      %p100 = scmp.ne.s32.totalorder %s92, %s94
      %p101 = scmp.eq.s32.totalorder %s21, 1
      %p102 = por %p100, %p101
      %p103 = scmp.ne.s32.totalorder %s94, %s95
      %p104 = scmp.eq.s32.totalorder %s21, 0
      %p105 = por %p103, %p104
      %p106 = scmp.ne.s32.totalorder %s94, %s95
      %p107 = scmp.eq.s32.totalorder %s22, 1
      %p108 = por %p106, %p107
      %p110 = scmp.ne.s32.totalorder %s95, %s109
      %p111 = scmp.eq.s32.totalorder %s22, 0
      %p112 = por %p110, %p111
      %s114 = sadd.s32 %s113, 1
      %p117 = scmp.eq.s32.totalorder %s16, 1
      %p118 = scmp.ne.s32.totalorder %s113, %s115
      %p119 = scmp.eq.s32.totalorder %s16, 0
      %p120 = por %p118, %p119
      %p121 = scmp.ne.s32.totalorder %s113, %s115
      %p122 = scmp.eq.s32.totalorder %s21, 1
      %p123 = por %p121, %p122
      %p124 = scmp.ne.s32.totalorder %s115, %s116
      %p125 = scmp.eq.s32.totalorder %s21, 0
      %p126 = por %p124, %p125
      %p127 = scmp.ne.s32.totalorder %s115, %s116
      %p128 = scmp.eq.s32.totalorder %s22, 1
      %p129 = por %p127, %p128
      %p131 = scmp.ne.s32.totalorder %s116, %s130
      %p132 = scmp.eq.s32.totalorder %s22, 0
      %p133 = por %p131, %p132
      %s134 = ssub.s32 %s16, %s23
      %p135 = scmp.eq.s32.totalorder %s134, 0
      %s137 = sadd.s32 %s136, 1
      %s138 = scalar_select %p135, %s136, %s137
      %p141 = pneg %p135
      %p142 = scmp.eq.s32.totalorder %s16, 1
      %p143 = por %p141, %p142
      %p144 = scmp.ne.s32.totalorder %s136, %s139
      %p145 = scmp.eq.s32.totalorder %s16, 0
      %p146 = por %p144, %p145
      %p147 = scmp.ne.s32.totalorder %s136, %s139
      %p148 = scmp.eq.s32.totalorder %s21, 1
      %p149 = por %p147, %p148
      %p150 = scmp.ne.s32.totalorder %s139, %s140
      %p151 = scmp.eq.s32.totalorder %s21, 0
      %p152 = por %p150, %p151
      %p153 = scmp.ne.s32.totalorder %s139, %s140
      %p154 = scmp.eq.s32.totalorder %s22, 1
      %p155 = por %p153, %p154
      %p157 = scmp.ne.s32.totalorder %s140, %s156
      %p158 = scmp.eq.s32.totalorder %s22, 0
      %p159 = por %p157, %p158
      %s160 = ssub.s32 %s16, %s23
      %p161 = scmp.eq.s32.totalorder %s160, 0
      %s163 = sadd.s32 %s162, 1
      %s164 = scalar_select %p161, %s162, %s163
      %p167 = pneg %p161
      %p168 = scmp.eq.s32.totalorder %s16, 1
      %p169 = por %p167, %p168
      %p170 = scmp.ne.s32.totalorder %s162, %s165
      %p171 = scmp.eq.s32.totalorder %s16, 0
      %p172 = por %p170, %p171
      %p173 = scmp.ne.s32.totalorder %s162, %s165
      %p174 = scmp.eq.s32.totalorder %s21, 1
      %p175 = por %p173, %p174
      %p176 = scmp.ne.s32.totalorder %s165, %s166
      %p177 = scmp.eq.s32.totalorder %s21, 0
      %p178 = por %p176, %p177
      %p179 = scmp.ne.s32.totalorder %s165, %s166
      %p180 = scmp.eq.s32.totalorder %s22, 1
      %p181 = por %p179, %p180
      %p183 = scmp.ne.s32.totalorder %s166, %s182
      %p184 = scmp.eq.s32.totalorder %s22, 0
      %p185 = por %p183, %p184
      %p186 = scmp.le.s32.totalorder 1, %s16
      %p187 = scmp.lt.s32.totalorder %s16, 3
      %p188 = pnand %p186, %p187
      %p189 = pneg %p188
      // Predicated region
      $region9: #{_bottleneck_forward_impl.1} parent=5 // pred_check
        _
      $region10: #{_bottleneck_forward_impl.1} parent=5 // pred_check_branch
        %191 = sbr.rel (%p188) target = $region12
      $region11: #{_bottleneck_forward_impl.1} parent=5 // pred_region
        %s192 = ssub.s32 %s16, 1
        // Predicated region
        $region13: #{_bottleneck_forward_impl.1} parent=11 // pred_check
          %p193 = pneg %p63
        $region14: #{_bottleneck_forward_impl.1} parent=11 // pred_check_branch
          %195 = sbr.rel (%p193) target = $region16
        $region15: #{_bottleneck_forward_impl.1} parent=11 // pred_region
          _
        $region16: #{_bottleneck_forward_impl.1} parent=11 // pred_fallthru
          _
        // Predicated region
        $region17: #{_bottleneck_forward_impl.1} parent=11 // pred_check
          %p196 = pneg %p84
        $region18: #{_bottleneck_forward_impl.1} parent=11 // pred_check_branch
          %198 = sbr.rel (%p196) target = $region20
        $region19: #{_bottleneck_forward_impl.1} parent=11 // pred_region
          _
        $region20: #{_bottleneck_forward_impl.1} parent=11 // pred_fallthru
          _
        // Predicated region
        $region21: #{_bottleneck_forward_impl.1} parent=11 // pred_check
          %p199 = pneg %p105
        $region22: #{_bottleneck_forward_impl.1} parent=11 // pred_check_branch
          %201 = sbr.rel (%p199) target = $region24
        $region23: #{_bottleneck_forward_impl.1} parent=11 // pred_region
          _
        $region24: #{_bottleneck_forward_impl.1} parent=11 // pred_fallthru
          _
        // Predicated region
        $region25: #{_bottleneck_forward_impl.1} parent=11 // pred_check
          %p202 = pneg %p126
        $region26: #{_bottleneck_forward_impl.1} parent=11 // pred_check_branch
          %204 = sbr.rel (%p202) target = $region28
        $region27: #{_bottleneck_forward_impl.1} parent=11 // pred_region
          _
        $region28: #{_bottleneck_forward_impl.1} parent=11 // pred_fallthru
          _
      $region12: #{_bottleneck_forward_impl.1} parent=5 // pred_fallthru
        _
      %p205 = scmp.lt.s32.totalorder %s16, 2
      // Predicated region
      $region29: #{_bottleneck_forward_impl.1} parent=5 // pred_check
        %p206 = pneg %p205
      $region30: #{_bottleneck_forward_impl.1} parent=5 // pred_check_branch
        %208 = sbr.rel (%p206) target = $region32
      $region31: #{_bottleneck_forward_impl.1} parent=5 // pred_region
        // Predicated region
        $region33: #{_bottleneck_forward_impl.1} parent=31 // pred_check
          %p209 = pneg %p36
        $region34: #{_bottleneck_forward_impl.1} parent=31 // pred_check_branch
          %211 = sbr.rel (%p209) target = $region36
        $region35: #{_bottleneck_forward_impl.1} parent=31 // pred_region
          %p212 = scmp.lt.s32.totalorder %s16, 1
          %s213 = scalar_select %p212, %s16, 1
          %s214 = smul.addr %s213, 8
          %s215 = scalar_lea.vmem %s0, %s214
        $region36: #{_bottleneck_forward_impl.1} parent=31 // pred_fallthru
          _
      $region32: #{_bottleneck_forward_impl.1} parent=5 // pred_fallthru
        _
      %p216 = scmp.le.s32.totalorder 1, %s16
      %p217 = scmp.lt.s32.totalorder %s16, 3
      %p218 = pnand %p216, %p217
      %p219 = pneg %p218
      // Predicated region
      $region37: #{_bottleneck_forward_impl.1} parent=5 // pred_check
        _
      $region38: #{_bottleneck_forward_impl.1} parent=5 // pred_check_branch
        %221 = sbr.rel (%p218) target = $region40
      $region39: #{_bottleneck_forward_impl.1} parent=5 // pred_region
        %s222 = ssub.s32 %s16, 1
        %p223 = scmp.lt.s32.totalorder %s21, 1
        %s224 = scalar_select %p223, %s21, 1
        %s225 = smul.addr %s224, 8
        %s226 = scalar_lea.vmem %s0, %s225
        %p227 = pneg %p42
        %p228 = pneg %p39
        %p229 = pneg %p63
        %p230 = pneg %p60
        %p231 = pneg %p84
        %p232 = pneg %p81
        %p233 = pneg %p105
        %p234 = pneg %p102
        %p235 = pneg %p126
        %p236 = pneg %p123
        %p237 = pneg %p152
        %p238 = pneg %p149
        %s239 = sand.u32 %s139, 1
        %s240 = scalar_lea.sflag [#allocation3], %s239
        %s241 = sand.u32 %s139, 1
        %s242 = smul.addr %s241, 8
        %s243 = scalar_lea.vmem [#allocation2], %s242
        %p244 = pneg %p178
        %p245 = pneg %p175
        %p246 = scmp.lt.s32.totalorder %s21, 1
        %s247 = scalar_select %p246, %s21, 1
        %s248 = smul.addr %s247, 8
        %s249 = scalar_lea.vmem %s6, %s248
        %p250 = scmp.lt.s32.totalorder %s21, 1
        %s251 = scalar_select %p250, %s21, 1
        %s252 = smul.addr %s251, 8
        %s253 = scalar_lea.vmem %s0, %s252
        %p254 = scmp.lt.s32.totalorder %s21, 1
        %s255 = scalar_select %p254, %s21, 1
        %s256 = smul.addr %s255, 8
        %s257 = scalar_lea.vmem %s6, %s256
        %v258 = vld [vmem:[%s253] sm:$0xff]
        %v259 = vld [vmem:[%s1] sm:$0xff]
        %v260 = vld [vmem:[%s1 + $0x8] sm:$0xff]
        %v261 = vld [vmem:[%s1 + $0x10] sm:$0xff]
        %v262 = vld [vmem:[%s1 + $0x18] sm:$0xff]
        %v263 = vld [vmem:[%s2] sm:$0x1]
        %v265 = vlaneseq
        %v266 = vshrl.u32 %v265, 7
        %v267 = vsub.s32 0, %v266
        %v268 = vrot.slane %v263, %v267
        %vm270 = vcmask 261120
        %v272 = vsel %vm270, %v258, 0
        %274 = vmatprep.subr.mxu0 0.0
        %275 = vmatpush1.msra.mxu0 %v259
        %276 = vmatprep.subr.mxu0 0.0
        %277 = vmatpush1.msra.mxu0 %v260
        %278 = vmatprep.subr.mxu0 0.0
        %279 = vmatpush1.msra.mxu0 %v261
        %280 = vmatprep.subr.mxu0 0.0
        %281 = vmatpush1.msra.mxu0 %v262
        %282 = vmatprep.subr.mxu0 0.0
        %283 = vmatpush1.msra.mxu0 0.0
        %284 = vmatprep.subr.mxu0 0.0
        %285 = vmatpush1.msra.mxu0 0.0
        %286 = vmatprep.subr.mxu0 0.0
        %287 = vmatpush1.msra.mxu0 0.0
        %288 = vmatprep.subr.mxu0 0.0
        %289 = vmatpush1.msra.mxu0 0.0
        %290 = vmatprep.subr.mxu0 0.0
        %291 = vmatpush1.msra.mxu0 0.0
        %292 = vmatprep.subr.mxu0 0.0
        %293 = vmatpush1.msra.mxu0 0.0
        %294 = vmatprep.subr.mxu0 0.0
        %295 = vmatpush1.msra.mxu0 0.0
        %296 = vmatprep.subr.mxu0 0.0
        %297 = vmatpush1.msra.mxu0 0.0
        %298 = vmatprep.subr.mxu0 0.0
        %299 = vmatpush1.msra.mxu0 0.0
        %300 = vmatprep.subr.mxu0 0.0
        %301 = vmatpush1.msra.mxu0 0.0
        %302 = vmatprep.subr.mxu0 0.0
        %303 = vmatpush1.msra.mxu0 0.0
        %304 = vmatprep.subr.mxu0 0.0
        %305 = vmatpush1.msra.mxu0 0.0
        %306 = vmatprep.subr.mxu0 0.0
        %307 = vmatpush1.msra.mxu0 0.0
        %308 = vmatprep.subr.mxu0 0.0
        %309 = vmatpush1.msra.mxu0 0.0
        %310 = vmatprep.subr.mxu0 0.0
        %311 = vmatpush1.msra.mxu0 0.0
        %312 = vmatprep.subr.mxu0 0.0
        %313 = vmatpush1.msra.mxu0 0.0
        %314 = vmatprep.subr.mxu0 0.0
        %315 = vmatpush1.msra.mxu0 0.0
        %316 = vmatprep.subr.mxu0 0.0
        %317 = vmatpush1.msra.mxu0 0.0
        %318 = vmatprep.subr.mxu0 0.0
        %319 = vmatpush1.msra.mxu0 0.0
        %320 = vmatprep.subr.mxu0 0.0
        %321 = vmatpush1.msra.mxu0 0.0
        %322 = vmatprep.subr.mxu0 0.0
        %323 = vmatpush1.msra.mxu0 0.0
        %324 = vmatprep.subr.mxu0 0.0
        %325 = vmatpush1.msra.mxu0 0.0
        %326 = vmatprep.subr.mxu0 0.0
        %327 = vmatpush1.msra.mxu0 0.0
        %328 = vmatprep.subr.mxu0 0.0
        %329 = vmatpush1.msra.mxu0 0.0
        %330 = vmatprep.subr.mxu0 0.0
        %331 = vmatpush1.msra.mxu0 0.0
        %332 = vmatprep.subr.mxu0 0.0
        %333 = vmatpush1.msra.mxu0 0.0
        %334 = vmatprep.subr.mxu0 0.0
        %335 = vmatpush1.msra.mxu0 0.0
        %336 = vmatprep.subr.mxu0 0.0
        %337 = vmatpush1.msra.mxu0 0.0
        %338 = vmatprep.mubr.f32.mxu0 0.0
        %339 = vmatmul.mubr.f32.gmra.mrb[0].mxu0 %v272
        %v340 = vpop.f32.mrb[0].mxu0
        %v341 = vadd.f32 %v268, %v340
        %v342 = vpop.f32.mrb[0].mxu0
        %343 = vdwg.mxu0
        %vm344 = vcmask 130048
        %345 = vst.msk [vmem:[%s257] sm:$0xff] %vm344, %v341
        %v346 = vld [vmem:[%s3] sm:$0xff]
        %v347 = vld [vmem:[%s3 + $0x8] sm:$0xff]
        %v348 = vld [vmem:[%s4] sm:$0x1]
        %v350 = vlaneseq
        %v351 = vshrl.u32 %v350, 7
        %v352 = vsub.s32 0, %v351
        %v353 = vrot.slane %v348, %v352
        %v356 = vsel %vm344, %v341, 0
        %358 = vmatprep.subr.mxu0 0.0
        %359 = vmatpush1.msra.mxu0 %v346
        %360 = vmatprep.subr.mxu0 0.0
        %361 = vmatpush1.msra.mxu0 %v347
        %362 = vmatprep.subr.mxu0 0.0
        %363 = vmatpush1.msra.mxu0 0.0
        %364 = vmatprep.subr.mxu0 0.0
        %365 = vmatpush1.msra.mxu0 0.0
        %366 = vmatprep.subr.mxu0 0.0
        %367 = vmatpush1.msra.mxu0 0.0
        %368 = vmatprep.subr.mxu0 0.0
        %369 = vmatpush1.msra.mxu0 0.0
        %370 = vmatprep.subr.mxu0 0.0
        %371 = vmatpush1.msra.mxu0 0.0
        %372 = vmatprep.subr.mxu0 0.0
        %373 = vmatpush1.msra.mxu0 0.0
        %374 = vmatprep.subr.mxu0 0.0
        %375 = vmatpush1.msra.mxu0 0.0
        %376 = vmatprep.subr.mxu0 0.0
        %377 = vmatpush1.msra.mxu0 0.0
        %378 = vmatprep.subr.mxu0 0.0
        %379 = vmatpush1.msra.mxu0 0.0
        %380 = vmatprep.subr.mxu0 0.0
        %381 = vmatpush1.msra.mxu0 0.0
        %382 = vmatprep.subr.mxu0 0.0
        %383 = vmatpush1.msra.mxu0 0.0
        %384 = vmatprep.subr.mxu0 0.0
        %385 = vmatpush1.msra.mxu0 0.0
        %386 = vmatprep.subr.mxu0 0.0
        %387 = vmatpush1.msra.mxu0 0.0
        %388 = vmatprep.subr.mxu0 0.0
        %389 = vmatpush1.msra.mxu0 0.0
        %390 = vmatprep.subr.mxu0 0.0
        %391 = vmatpush1.msra.mxu0 0.0
        %392 = vmatprep.subr.mxu0 0.0
        %393 = vmatpush1.msra.mxu0 0.0
        %394 = vmatprep.subr.mxu0 0.0
        %395 = vmatpush1.msra.mxu0 0.0
        %396 = vmatprep.subr.mxu0 0.0
        %397 = vmatpush1.msra.mxu0 0.0
        %398 = vmatprep.subr.mxu0 0.0
        %399 = vmatpush1.msra.mxu0 0.0
        %400 = vmatprep.subr.mxu0 0.0
        %401 = vmatpush1.msra.mxu0 0.0
        %402 = vmatprep.subr.mxu0 0.0
        %403 = vmatpush1.msra.mxu0 0.0
        %404 = vmatprep.subr.mxu0 0.0
        %405 = vmatpush1.msra.mxu0 0.0
        %406 = vmatprep.subr.mxu0 0.0
        %407 = vmatpush1.msra.mxu0 0.0
        %408 = vmatprep.subr.mxu0 0.0
        %409 = vmatpush1.msra.mxu0 0.0
        %410 = vmatprep.subr.mxu0 0.0
        %411 = vmatpush1.msra.mxu0 0.0
        %412 = vmatprep.subr.mxu0 0.0
        %413 = vmatpush1.msra.mxu0 0.0
        %414 = vmatprep.subr.mxu0 0.0
        %415 = vmatpush1.msra.mxu0 0.0
        %416 = vmatprep.subr.mxu0 0.0
        %417 = vmatpush1.msra.mxu0 0.0
        %418 = vmatprep.subr.mxu0 0.0
        %419 = vmatpush1.msra.mxu0 0.0
        %420 = vmatprep.subr.mxu0 0.0
        %421 = vmatpush1.msra.mxu0 0.0
        %422 = vmatprep.mubr.f32.mxu0 0.0
        %423 = vmatmul.mubr.f32.gmra.mrb[0].mxu0 %v356
        %v424 = vpop.f32.mrb[0].mxu0
        %v425 = vadd.f32 %v353, %v424
        %v426 = vpop.f32.mrb[0].mxu0
        %427 = vdwg.mxu0
        %428 = vst.msk [vmem:[%s243] sm:$0xff] %vm270, %v425
        %s429 = sand.u32 %s139, 1
        %s430 = scalar_lea.sflag [#allocation3], %s429
        %s431 = sand.u32 %s139, 1
        %s432 = smul.addr %s431, 8
        %s433 = scalar_lea.vmem [#allocation2], %s432
        %p434 = scmp.lt.s32.totalorder %s21, 1
        %s435 = scalar_select %p434, %s21, 1
        %s436 = smul.addr %s435, 8
        %s437 = scalar_lea.vmem %s6, %s436
        // Predicated region
        $region41: #{_bottleneck_forward_impl.1} parent=39 // pred_check
          %p438 = pneg %p149
        $region42: #{_bottleneck_forward_impl.1} parent=39 // pred_check_branch
          %440 = sbr.rel (%p438) target = $region44
        $region43: #{_bottleneck_forward_impl.1} parent=39 // pred_region
          %s442 = ssub.s32 128, 128
          %443 = vsyncadd %s430, %s442
          %s444 = smul.addr %s21, 128
          %s445 = scalar_lea.hbm %s5, %s444
          %s447 = sshll.u32 %s433, 4
          %s448 = int_to_ptr.vmem [resolvable:$true] %s447
          %450 = dma.vmem_to_hbm [thread:$0]  %s448, 128, %s445, %s430
        $region44: #{_bottleneck_forward_impl.1} parent=39 // pred_fallthru
          _
        // Predicated region
        $region45: #{_bottleneck_forward_impl.1} parent=39 // pred_check
          %p451 = pneg %p175
        $region46: #{_bottleneck_forward_impl.1} parent=39 // pred_check_branch
          %453 = sbr.rel (%p451) target = $region48
        $region47: #{_bottleneck_forward_impl.1} parent=39 // pred_region
          _
        $region48: #{_bottleneck_forward_impl.1} parent=39 // pred_fallthru
          _
      $region40: #{_bottleneck_forward_impl.1} parent=5 // pred_fallthru
        _
      %p454 = scmp.le.s32.totalorder 2, %s16
      // Predicated region
      $region49: #{_bottleneck_forward_impl.1} parent=5 // pred_check
        %p455 = pneg %p454
      $region50: #{_bottleneck_forward_impl.1} parent=5 // pred_check_branch
        %457 = sbr.rel (%p455) target = $region52
      $region51: #{_bottleneck_forward_impl.1} parent=5 // pred_region
        %s458 = ssub.s32 %s16, 2
        // Predicated region
        $region53: #{_bottleneck_forward_impl.1} parent=51 // pred_check
          %p459 = pneg %p155
        $region54: #{_bottleneck_forward_impl.1} parent=51 // pred_check_branch
          %461 = sbr.rel (%p459) target = $region56
        $region55: #{_bottleneck_forward_impl.1} parent=51 // pred_region
          %s462 = sand.u32 %s140, 1
          %s463 = scalar_lea.sflag [#allocation3], %s462
          %s464 = sand.u32 %s140, 1
          %s465 = smul.addr %s464, 8
          %s466 = scalar_lea.vmem [#allocation2], %s465
          %467 = dma.done %s463, 128
        $region56: #{_bottleneck_forward_impl.1} parent=51 // pred_fallthru
          _
        // Predicated region
        $region57: #{_bottleneck_forward_impl.1} parent=51 // pred_check
          %p468 = pneg %p181
        $region58: #{_bottleneck_forward_impl.1} parent=51 // pred_check_branch
          %470 = sbr.rel (%p468) target = $region60
        $region59: #{_bottleneck_forward_impl.1} parent=51 // pred_region
          %p471 = scmp.lt.s32.totalorder %s22, 1
          %s472 = scalar_select %p471, %s22, 1
          %s473 = smul.addr %s472, 8
          %s474 = scalar_lea.vmem %s6, %s473
        $region60: #{_bottleneck_forward_impl.1} parent=51 // pred_fallthru
          _
      $region52: #{_bottleneck_forward_impl.1} parent=5 // pred_fallthru
        _
    $region6: #{_bottleneck_forward_impl.1} parent=1 // loop_footer
      %s20 = sadd.s32 1, %s16
    $region7: #{_bottleneck_forward_impl.1} parent=1 // loop_footer_branch
      %15 = sbr.rel target = $region3
    $region8: #{_bottleneck_forward_impl.1} parent=1 // loop_exit
      _
    %475 = vsyncpa [#allocation3], 1
    %s476 = scalar_lea.sflag [#allocation3], 1
    %477 = vsyncpa %s476, 1

</llo_original>
